<compile_context>
chip_gen: v5e
topology: v5e:2x2
jax: 0.10.0
libtpu: 0.0.40
codegen_flags: <defaults>
</compile_context>

<pallas_src>
import functools

import jax
import jax.numpy as jnp
from jax import lax
from jax.experimental import pallas as pl
from jax.experimental.pallas import tpu as pltpu


_MIB = 1024 * 1024
_FUSED_VMEM_BUDGET = 40 * _MIB   # stay well under v7x's 64 MiB physical VMEM


def _round_up(x, m):
    return ((x + m - 1) // m) * m


def _vmem_limit_bytes(est):
    """Explicit scoped-VMEM limit when the estimate exceeds v5e's 16 MiB default."""
    if est <= 12 * _MIB:
        return None  # comfortably within every generation's scoped default
    return int(min(max(2 * est, 32 * _MIB), 48 * _MIB))


def _fused_vmem_estimate(T_p, d_in_p, d_out_p, q_tile, itemsize):
    # double-buffered pipeline blocks (x q-tile, resident x, Wq, [Wk|Wv], out)
    blocks = (2 * q_tile * d_in_p + 2 * T_p * d_in_p + 2 * d_in_p * d_out_p
              + 2 * d_in_p * 2 * d_out_p + 2 * q_tile * d_out_p) * itemsize
    scratch = 2 * T_p * d_out_p * itemsize                  # resident K and V
    temps = (q_tile * T_p + T_p * 2 * d_out_p + q_tile * 2 * d_out_p) * 4
    return blocks + scratch + temps


# --------------------------------------------------------------------------
# PATH A kernel: fully fused projection + attention (resident K/V scratch).
# --------------------------------------------------------------------------
def _fused_attn_kernel(xq_ref, xfull_ref, wq_ref, wkv_ref, o_ref, k_sc, v_sc,
                       *, seq_len, kv_len_p, d_out_p):
    # Project K and V ONCE into resident VMEM scratch (single 256-wide matmul
    # against [Wk|Wv]); the grid axis is "arbitrary" so step 0 always runs first.
    @pl.when(pl.program_id(0) == 0)
    def _project_kv():
        kv = jnp.dot(xfull_ref[...], wkv_ref[...],
                     preferred_element_type=jnp.float32)
        k_sc[...] = kv[:, :d_out_p].astype(k_sc.dtype)
        v_sc[...] = kv[:, d_out_p:].astype(v_sc.dtype)

    # q-tile prologue: q = x_tile @ (Wq / sqrt(d_k))  (scale folded in wrapper).
    q = jnp.dot(xq_ref[...], wq_ref[...], preferred_element_type=jnp.float32)

    # scores = q @ k^T without a transpose: contract the last dims.
    s = lax.dot_general(q.astype(k_sc.dtype), k_sc[...],
                        dimension_numbers=(((1,), (1,)), ((), ())),
                        preferred_element_type=jnp.float32)

    if kv_len_p != seq_len:
        # Zero-padded kv rows must never perturb the softmax.
        col = lax.broadcasted_iota(jnp.int32, s.shape, 1)
        s = jnp.where(col < seq_len, s, jnp.float32(-1e30))

    # Direct (single-pass, numerically stable) softmax: the whole kv range is
    # resident so no online rescaling is needed.  Stats kept in f32.
    m = jnp.max(s, axis=-1, keepdims=True)
    p = jnp.exp(s - m)
    l = jnp.sum(p, axis=-1, keepdims=True)
    ctx = jnp.dot(p.astype(v_sc.dtype), v_sc[...],
                  preferred_element_type=jnp.float32)
    o_ref[...] = (ctx * pl.reciprocal(l, approx=True)).astype(o_ref.dtype)


# --------------------------------------------------------------------------
# PATH B kernel A: packed Q/K/V projection (one matmul, N = 3*d_out_p).
# --------------------------------------------------------------------------
def _qkv_proj_kernel(x_ref, wqkv_ref, qkv_ref):
    qkv_ref[...] = jnp.dot(x_ref[...], wqkv_ref[...],
                           preferred_element_type=jnp.float32
                           ).astype(qkv_ref.dtype)


# --------------------------------------------------------------------------
# PATH B kernel B: flash attention with online softmax.
# grid = (num_q_tiles, num_kv_tiles); kv axis is the (sequential) reduction.
# --------------------------------------------------------------------------
def _flash_attn_kernel(q_ref, k_ref, v_ref, o_ref, m_sc, l_sc, acc_sc,
                       *, seq_len, kv_tile, needs_mask):
    ki = pl.program_id(1)
    last_kv = pl.num_programs(1) - 1

    @pl.when(ki == 0)
    def _init():
        m_sc[...] = jnp.full_like(m_sc, -jnp.inf)
        l_sc[...] = jnp.zeros_like(l_sc)
        acc_sc[...] = jnp.zeros_like(acc_sc)

    # scores = q @ k^T (1/sqrt(d_k) already folded into Wq in the wrapper).
    s = lax.dot_general(q_ref[...], k_ref[...],
                        dimension_numbers=(((1,), (1,)), ((), ())),
                        preferred_element_type=jnp.float32)

    if needs_mask:
        # Only the LAST kv tile contains zero-padded rows: gate the
        # iota/compare/select so it costs nothing on all the other kv steps.
        rem = seq_len - ki * kv_tile

        def _mask_last(s_val):
            col = lax.broadcasted_iota(jnp.int32, s_val.shape, 1)
            return jnp.where(col < rem, s_val, jnp.float32(-1e30))

        s = lax.cond(ki == last_kv, _mask_last, lambda s_val: s_val, s)

    # Online (numerically stable) softmax update — stats/acc kept in f32.
    m_prev = m_sc[...]
    m_new = jnp.maximum(m_prev, jnp.max(s, axis=-1, keepdims=True))
    alpha = jnp.exp(m_prev - m_new)
    p = jnp.exp(s - m_new)
    l_sc[...] = alpha * l_sc[...] + jnp.sum(p, axis=-1, keepdims=True)
    acc_sc[...] = alpha * acc_sc[...] + jnp.dot(
        p.astype(v_ref.dtype), v_ref[...], preferred_element_type=jnp.float32)
    m_sc[...] = m_new

    @pl.when(ki == last_kv)
    def _finalize():
        o_ref[...] = (acc_sc[...] * pl.reciprocal(l_sc[...], approx=True)
                      ).astype(o_ref.dtype)


# --------------------------------------------------------------------------
# Path drivers.
# --------------------------------------------------------------------------
def _fused_attention(x_p, wq_p, wkv_p, *, seq_len, T_p, d_in_p, d_out_p,
                     q_tile, dtype, vmem_limit):
    n_q = T_p // q_tile
    kernel = functools.partial(_fused_attn_kernel,
                               seq_len=seq_len, kv_len_p=T_p, d_out_p=d_out_p)
    return pl.pallas_call(
        kernel,
        out_shape=jax.ShapeDtypeStruct((T_p, d_out_p), dtype),
        grid_spec=pltpu.PrefetchScalarGridSpec(
            num_scalar_prefetch=0,
            grid=(n_q,),
            in_specs=[pl.BlockSpec((q_tile, d_in_p), lambda i: (i, 0)),   # x q-tile
                      pl.BlockSpec((T_p, d_in_p), lambda i: (0, 0)),      # full x (resident)
                      pl.BlockSpec((d_in_p, d_out_p), lambda i: (0, 0)),  # Wq (pre-scaled)
                      pl.BlockSpec((d_in_p, 2 * d_out_p), lambda i: (0, 0))],  # [Wk|Wv]
            out_specs=pl.BlockSpec((q_tile, d_out_p), lambda i: (i, 0)),
            scratch_shapes=[pltpu.VMEM((T_p, d_out_p), dtype),    # resident K
                            pltpu.VMEM((T_p, d_out_p), dtype)]),  # resident V
        # "arbitrary": the resident K/V scratch is filled on grid step 0, so the
        # q axis must run sequentially on one core (megacore sharding of this
        # axis would leave the second core's scratch uninitialized).
        compiler_params=pltpu.CompilerParams(
            dimension_semantics=("arbitrary",),
            vmem_limit_bytes=vmem_limit),
    )(x_p, x_p, wq_p, wkv_p)


def _flash_attention(x_p, wqkv_p, *, seq_len, T_p, d_in_p, d_out_p,
                     q_tile, kv_tile, dtype, qkv_dtype, itemsize):
    n_q = T_p // q_tile
    n_kv = T_p // kv_tile

    # ---- kernel A: packed Q/K/V projection ----
    est_proj = ((2 * q_tile * d_in_p + 2 * d_in_p * 3 * d_out_p
                 + 2 * q_tile * 3 * d_out_p) * itemsize
                + q_tile * 3 * d_out_p * 4)
    # TODO(synk): for very large d_in/d_out, single-buffer the constant-index
    # weight block (pipeline_mode=pl.Buffered(1)) or tile the d_out axis.
    qkv = pl.pallas_call(
        _qkv_proj_kernel,
        out_shape=jax.ShapeDtypeStruct((T_p, 3 * d_out_p), qkv_dtype),
        grid_spec=pltpu.PrefetchScalarGridSpec(
            num_scalar_prefetch=0,
            grid=(n_q,),
            in_specs=[pl.BlockSpec((q_tile, d_in_p), lambda i: (i, 0)),
                      pl.BlockSpec((d_in_p, 3 * d_out_p), lambda i: (0, 0))],
            out_specs=pl.BlockSpec((q_tile, 3 * d_out_p), lambda i: (i, 0))),
        compiler_params=pltpu.CompilerParams(
            dimension_semantics=("parallel",),
            vmem_limit_bytes=_vmem_limit_bytes(est_proj)),
    )(x_p, wqkv_p)

    # ---- kernel B: flash attention over (q-tile, kv-tile) grid ----
    kv_itemsize = jnp.dtype(qkv_dtype).itemsize
    est_attn = ((2 * q_tile * d_out_p + 4 * kv_tile * d_out_p) * kv_itemsize
                + 2 * q_tile * d_out_p * itemsize
                + q_tile * (d_out_p + 2) * 4
                + 2 * q_tile * kv_tile * 4)
    kernel = functools.partial(_flash_attn_kernel, seq_len=seq_len,
                               kv_tile=kv_tile, needs_mask=(T_p != seq_len))
    return pl.pallas_call(
        kernel,
        out_shape=jax.ShapeDtypeStruct((T_p, d_out_p), dtype),
        grid_spec=pltpu.PrefetchScalarGridSpec(
            num_scalar_prefetch=0,
            grid=(n_q, n_kv),
            # q / k / v are column blocks 0 / 1 / 2 of the packed qkv array.
            in_specs=[pl.BlockSpec((q_tile, d_out_p), lambda qi, ki: (qi, 0)),
                      pl.BlockSpec((kv_tile, d_out_p), lambda qi, ki: (ki, 1)),
                      pl.BlockSpec((kv_tile, d_out_p), lambda qi, ki: (ki, 2))],
            out_specs=pl.BlockSpec((q_tile, d_out_p), lambda qi, ki: (qi, 0)),
            scratch_shapes=[pltpu.VMEM((q_tile, 1), jnp.float32),        # running max
                            pltpu.VMEM((q_tile, 1), jnp.float32),        # running sum
                            pltpu.VMEM((q_tile, d_out_p), jnp.float32)]),  # acc
        compiler_params=pltpu.CompilerParams(
            dimension_semantics=("parallel", "arbitrary"),
            vmem_limit_bytes=_vmem_limit_bytes(est_attn)),
    )(qkv, qkv, qkv)


# --------------------------------------------------------------------------
# Public wrapper: pad to lane/sublane-friendly shapes, pick a path, slice.
# --------------------------------------------------------------------------
def self_attention_v1(x, w_query, w_key, w_value, *,
                      q_tile=None, kv_tile=None, qkv_dtype=None,
                      force_flash=False):
    T, d_in = x.shape
    d_out = w_query.shape[1]
    dtype = x.dtype
    qkv_dtype = dtype if qkv_dtype is None else jnp.dtype(qkv_dtype)

    # Lane-dense padding (last dims -> multiples of 128).  Zero padding is
    # exact for the projections; padded kv rows are masked in-kernel and
    # padded output rows/cols sliced away below.
    d_in_p = _round_up(d_in, 128)
    d_out_p = _round_up(d_out, 128)

    # Fold 1/sqrt(d_k) (d_k = ORIGINAL d_out) into W_query: removes an
    # O(tq*tk) VALU multiply from every attention inner step.
    scale = 1.0 / float(d_out) ** 0.5
    wq_scaled = w_query * jnp.asarray(scale, w_query.dtype)

    # Row tiling: big q tiles (less per-step overhead, fewer K/V re-reads),
    # kv tiles sized to fill the 256-wide v6e/v7x MXU.  Both must divide T_p.
    q_tile = int(q_tile) if q_tile is not None else min(512, _round_up(T, 8))
    kv_tile = int(kv_tile) if kv_tile is not None else min(512, q_tile)
    assert q_tile % 8 == 0 and kv_tile % 8 == 0
    row_align = max(q_tile, kv_tile)
    assert row_align % q_tile == 0 and row_align % kv_tile == 0
    T_p = _round_up(T, row_align)

    x_p = jnp.zeros((T_p, d_in_p), dtype).at[:T, :d_in].set(x)
    wq_p = jnp.zeros((d_in_p, d_out_p), w_query.dtype).at[:d_in, :d_out].set(wq_scaled)
    wk_p = jnp.zeros((d_in_p, d_out_p), w_key.dtype).at[:d_in, :d_out].set(w_key)
    wv_p = jnp.zeros((d_in_p, d_out_p), w_value.dtype).at[:d_in, :d_out].set(w_value)

    itemsize = jnp.dtype(dtype).itemsize
    est_fused = _fused_vmem_estimate(T_p, d_in_p, d_out_p, q_tile, itemsize)

    if (not force_flash) and est_fused <= _FUSED_VMEM_BUDGET:
        out_p = _fused_attention(
            x_p, wq_p, jnp.concatenate([wk_p, wv_p], axis=1),
            seq_len=T, T_p=T_p, d_in_p=d_in_p, d_out_p=d_out_p,
            q_tile=q_tile, dtype=dtype,
            vmem_limit=_vmem_limit_bytes(est_fused))
    else:
        out_p = _flash_attention(
            x_p, jnp.concatenate([wq_p, wk_p, wv_p], axis=1),
            seq_len=T, T_p=T_p, d_in_p=d_in_p, d_out_p=d_out_p,
            q_tile=q_tile, kv_tile=kv_tile, dtype=dtype,
            qkv_dtype=qkv_dtype, itemsize=itemsize)

    return out_p[:T, :d_out]


def self_attention_ref(x, w_query, w_key, w_value):
    # Pure-JAX reference mirroring the PyTorch forward.
    q = x @ w_query
    k = x @ w_key
    v = x @ w_value
    scores = q @ k.T
    d_k = k.shape[-1]
    w = jax.nn.softmax(scores / jnp.sqrt(jnp.float32(d_k)), axis=-1)
    return w @ v


if __name__ == "__main__":
    key = jax.random.PRNGKey(0)
    k_x, k_q, k_k, k_v, k_x2 = jax.random.split(key, 5)

    # Small shapes implied by the module: seq=8, d_in=32, d_out=32.
    T, d_in, d_out = 8, 32, 32

    x = jax.random.normal(k_x, (T, d_in), dtype=jnp.float32)
    # Deterministic parameter init mimicking torch.rand (uniform [0, 1)).
    w_query = jax.random.uniform(k_q, (d_in, d_out), dtype=jnp.float32)
    w_key = jax.random.uniform(k_k, (d_in, d_out), dtype=jnp.float32)
    w_value = jax.random.uniform(k_v, (d_in, d_out), dtype=jnp.float32)

    # Path A (fused single-kernel) at the module's native shape.
    out = jax.block_until_ready(self_attention_v1(x, w_query, w_key, w_value))
    ref = self_attention_ref(x, w_query, w_key, w_value)
    assert out.shape == (T, d_out)
    # approx reciprocal in the softmax denominator => relative error ~1e-3.
    assert jnp.allclose(out, ref, atol=2e-2, rtol=2e-2)

    # Also exercise Path B (projection kernel + flash attention, multi kv-tile,
    # gated padding mask) at a small non-tile-aligned sequence.
    T2 = 200
    x2 = jax.random.normal(k_x2, (T2, d_in), dtype=jnp.float32)
    out2 = jax.block_until_ready(
        self_attention_v1(x2, w_query, w_key, w_value,
                          force_flash=True, q_tile=128, kv_tile=128))
    ref2 = self_attention_ref(x2, w_query, w_key, w_value)
    assert out2.shape == (T2, d_out)
    assert jnp.allclose(out2, ref2, atol=2e-2, rtol=2e-2)

    print("KERNEL_OK")
</pallas_src>

<mosaic_0001>
module attributes {stable_mosaic.version = 11 : i64} {
  func.func @_fused_attn_kernel(%arg0: i32, %arg1: memref<8x128xf32, #tpu.memory_space<vmem>>, %arg2: memref<8x128xf32, #tpu.memory_space<vmem>>, %arg3: memref<128x128xf32, #tpu.memory_space<vmem>>, %arg4: memref<128x256xf32, #tpu.memory_space<vmem>>, %arg5: memref<8x128xf32, #tpu.memory_space<vmem>>, %arg6: memref<8x128xf32, #tpu.memory_space<vmem>>, %arg7: memref<8x128xf32, #tpu.memory_space<vmem>>) attributes {dimension_semantics = [#tpu.dimension_semantics<arbitrary>], iteration_bounds = array<i64: 1>, scalar_prefetch = 0 : i64, scratch_operands = 2 : i64, tpu.core_type = #tpu.core_type<tc>, window_params = [{transform_indices = @transform_0, window_bounds = array<i64: 8, 128>}, {pipeline_mode = #tpu.pipeline_mode<synchronous>, transform_indices = @transform_1, window_bounds = array<i64: 8, 128>}, {pipeline_mode = #tpu.pipeline_mode<synchronous>, transform_indices = @transform_2, window_bounds = array<i64: 128, 128>}, {pipeline_mode = #tpu.pipeline_mode<synchronous>, transform_indices = @transform_3, window_bounds = array<i64: 128, 256>}, {transform_indices = @transform_4, window_bounds = array<i64: 8, 128>}]} {
    %c0_i32 = arith.constant 0 : i32
    %0 = arith.cmpi eq, %arg0, %c0_i32 : i32
    %1 = arith.extui %0 : i1 to i32
    %c0_i32_0 = arith.constant 0 : i32
    %2 = arith.cmpi ne, %1, %c0_i32_0 : i32
    scf.if %2 {
      %c0_14 = arith.constant 0 : index
      %c0_15 = arith.constant 0 : index
      %21 = vector.load %arg2[%c0_14, %c0_15] : memref<8x128xf32, #tpu.memory_space<vmem>>, vector<8x128xf32>
      %c0_16 = arith.constant 0 : index
      %c0_17 = arith.constant 0 : index
      %22 = vector.load %arg4[%c0_16, %c0_17] : memref<128x256xf32, #tpu.memory_space<vmem>>, vector<128x256xf32>
      %cst_18 = arith.constant dense<0.000000e+00> : vector<8x256xf32>
      %23 = tpu.matmul %21, %22, %cst_18 {dimension_numbers = #tpu.dot_dimension_numbers<[1], [0], [0], [1], [0, 0, 1, 1], [], []>} : vector<8x128xf32>, vector<128x256xf32>, vector<8x256xf32> -> vector<8x256xf32>
      %24 = vector.extract_strided_slice %23 {offsets = [0, 0], sizes = [8, 128], strides = [1, 1]} : vector<8x256xf32> to vector<8x128xf32>
      %c0_19 = arith.constant 0 : index
      %c0_20 = arith.constant 0 : index
      %25 = vector.load %arg6[%c0_19, %c0_20] : memref<8x128xf32, #tpu.memory_space<vmem>>, vector<8x128xf32>
      tpu.vector_store %arg6[%c0_19, %c0_20], %24 {strides = array<i32>} : memref<8x128xf32, #tpu.memory_space<vmem>>, vector<8x128xf32>,
      %26 = vector.extract_strided_slice %23 {offsets = [0, 128], sizes = [8, 128], strides = [1, 1]} : vector<8x256xf32> to vector<8x128xf32>
      %c0_21 = arith.constant 0 : index
      %c0_22 = arith.constant 0 : index
      %27 = vector.load %arg7[%c0_21, %c0_22] : memref<8x128xf32, #tpu.memory_space<vmem>>, vector<8x128xf32>
      tpu.vector_store %arg7[%c0_21, %c0_22], %26 {strides = array<i32>} : memref<8x128xf32, #tpu.memory_space<vmem>>, vector<8x128xf32>,
    } else {
    }
    %c0 = arith.constant 0 : index
    %c0_1 = arith.constant 0 : index
    %3 = vector.load %arg1[%c0, %c0_1] : memref<8x128xf32, #tpu.memory_space<vmem>>, vector<8x128xf32>
    %c0_2 = arith.constant 0 : index
    %c0_3 = arith.constant 0 : index
    %4 = vector.load %arg3[%c0_2, %c0_3] : memref<128x128xf32, #tpu.memory_space<vmem>>, vector<128x128xf32>
    %cst = arith.constant dense<0.000000e+00> : vector<8x128xf32>
    %5 = tpu.matmul %3, %4, %cst {dimension_numbers = #tpu.dot_dimension_numbers<[1], [0], [0], [1], [0, 0, 1, 1], [], []>} : vector<8x128xf32>, vector<128x128xf32>, vector<8x128xf32> -> vector<8x128xf32>
    %c0_4 = arith.constant 0 : index
    %c0_5 = arith.constant 0 : index
    %6 = vector.load %arg6[%c0_4, %c0_5] : memref<8x128xf32, #tpu.memory_space<vmem>>, vector<8x128xf32>
    %cst_6 = arith.constant dense<0.000000e+00> : vector<8x8xf32>
    %7 = tpu.matmul %5, %6, %cst_6 {dimension_numbers = #tpu.dot_dimension_numbers<[1], [1], [0], [0], [0, 0, 1, 0], [], []>} : vector<8x128xf32>, vector<8x128xf32>, vector<8x8xf32> -> vector<8x8xf32>
    %cst_7 = arith.constant dense<0xFF800000> : vector<8xf32>
    %8 = vector.multi_reduction <maximumf>, %7, %cst_7 [1] : vector<8x8xf32> to vector<8xf32>
    %9 = vector.shape_cast %8 : vector<8xf32> to vector<8x1xf32>
    %10 = vector.broadcast %9 : vector<8x1xf32> to vector<8x8xf32>
    %11 = arith.subf %7, %10 : vector<8x8xf32>
    %12 = math.exp %11 : vector<8x8xf32>
    %cst_8 = arith.constant dense<0.000000e+00> : vector<8xf32>
    %13 = vector.multi_reduction <add>, %12, %cst_8 [1] : vector<8x8xf32> to vector<8xf32>
    %14 = vector.shape_cast %13 : vector<8xf32> to vector<8x1xf32>
    %c0_9 = arith.constant 0 : index
    %c0_10 = arith.constant 0 : index
    %15 = vector.load %arg7[%c0_9, %c0_10] : memref<8x128xf32, #tpu.memory_space<vmem>>, vector<8x128xf32>
    %cst_11 = arith.constant dense<0.000000e+00> : vector<8x128xf32>
    %16 = tpu.matmul %12, %15, %cst_11 {dimension_numbers = #tpu.dot_dimension_numbers<[1], [0], [0], [1], [0, 0, 1, 1], [], []>} : vector<8x8xf32>, vector<8x128xf32>, vector<8x128xf32> -> vector<8x128xf32>
    %17 = tpu.reciprocal %14 {approx = true} : vector<8x1xf32> -> vector<8x1xf32>
    %18 = vector.broadcast %17 : vector<8x1xf32> to vector<8x128xf32>
    %19 = arith.mulf %16, %18 : vector<8x128xf32>
    %c0_12 = arith.constant 0 : index
    %c0_13 = arith.constant 0 : index
    %20 = vector.load %arg5[%c0_12, %c0_13] : memref<8x128xf32, #tpu.memory_space<vmem>>, vector<8x128xf32>
    tpu.vector_store %arg5[%c0_12, %c0_13], %19 {strides = array<i32>} : memref<8x128xf32, #tpu.memory_space<vmem>>, vector<8x128xf32>,
    return
  }
  func.func @transform_0(%arg0: i32) -> (i32, i32) {
    %c0_i32 = arith.constant 0 : i32
    %c0_i32_0 = arith.constant 0 : i32
    return %arg0, %c0_i32 : i32, i32
  }
  func.func @transform_1(%arg0: i32) -> (i32, i32) {
    %c0_i32 = arith.constant 0 : i32
    %c0_i32_0 = arith.constant 0 : i32
    %c0_i32_1 = arith.constant 0 : i32
    return %c0_i32, %c0_i32_0 : i32, i32
  }
  func.func @transform_2(%arg0: i32) -> (i32, i32) {
    %c0_i32 = arith.constant 0 : i32
    %c0_i32_0 = arith.constant 0 : i32
    %c0_i32_1 = arith.constant 0 : i32
    return %c0_i32, %c0_i32_0 : i32, i32
  }
  func.func @transform_3(%arg0: i32) -> (i32, i32) {
    %c0_i32 = arith.constant 0 : i32
    %c0_i32_0 = arith.constant 0 : i32
    %c0_i32_1 = arith.constant 0 : i32
    return %c0_i32, %c0_i32_0 : i32, i32
  }
  func.func @transform_4(%arg0: i32) -> (i32, i32) {
    %c0_i32 = arith.constant 0 : i32
    %c0_i32_0 = arith.constant 0 : i32
    return %arg0, %c0_i32 : i32, i32
  }
}

</mosaic_0001>

<llo_original>
// kernel: tpu_custom_call.1
$region0: #{tpu_custom_call.1}
  #allocation0 [shape = 'u32[]', space=smem, size = 0x4, offset = 0x4, fixed_abs, tag = 'smem constant byte address 0x4 - core index']
  #allocation1 [shape = 'u32[72,128]{1,0:T(1,128)}', space=vmem, size = 0x9000, scoped, tag = 'internal scratch']
  #allocation2 [shape = 'f32[8,128]{1,0:T(8,128)}', space=vmem, size = 0x1000, scoped, tag = 'scratch operand']
  #allocation3 [shape = 'f32[8,128]{1,0:T(8,128)}', space=vmem, size = 0x1000, scoped, tag = 'scratch operand']
  %s0 = inlined_call_operand.hbm [shape: f32[8,128], index: 0, kind: input, shape index: {}]
  %s1 = inlined_call_operand.hbm [shape: f32[8,128], index: 1, kind: input, shape index: {}]
  %s2 = inlined_call_operand.hbm [shape: f32[128,128], index: 2, kind: input, shape index: {}]
  %s3 = inlined_call_operand.hbm [shape: f32[128,256], index: 3, kind: input, shape index: {}]
  %s4 = inlined_call_operand.hbm [shape: f32[8,128], index: 4, kind: output, shape index: {}]
  %s5 = sld [smem:[#allocation0]]
  $region46: #{tpu_custom_call.1} parent=0
    _
  %s7 = ssub.s32 1, %s5
  %s8 = scalar_select 0, %s7, %s5
  $region1: #{tpu_custom_call.1} parent=0
    #allocation4 [shape = 'u8[4096]{0}', space=vmem, size = 0x1000, scoped, tag = 'input window, operand 0, single buffered']
    #allocation5 [shape = 's32[1]{0}', space=sflag, size = 0x4, scoped, tag = 'scoped memory for tpu_custom_call.1']
    #allocation6 [shape = 's32[1]{0}', space=sflag, size = 0x4, scoped, tag = 'scoped memory for tpu_custom_call.1']
    #allocation7 [shape = 'u8[4096]{0}', space=vmem, size = 0x1000, scoped, tag = 'input window, operand 1, single buffered']
    #allocation8 [shape = 's32[1]{0}', space=sflag, size = 0x4, scoped, tag = 'scoped memory for tpu_custom_call.1']
    #allocation9 [shape = 'u8[65536]{0}', space=vmem, size = 0x10000, scoped, tag = 'input window, operand 2, single buffered']
    #allocation10 [shape = 'u8[131072]{0}', space=vmem, size = 0x20000, scoped, tag = 'input window, operand 3, single buffered']
    #allocation11 [shape = 's32[1]{0}', space=sflag, size = 0x4, scoped, tag = 'scoped memory for tpu_custom_call.1']
    #allocation12 [shape = 'u8[4096]{0}', space=vmem, size = 0x1000, scoped, tag = 'output window, operand 0, single buffered']
    %9 = vsyncpa [#allocation5], 0
    %10 = vsyncpa [#allocation8], 0
    %11 = vsyncpa [#allocation11], 0
    %12 = vsyncpa [#allocation6], 0
    // Predicated region
    $region2: #{tpu_custom_call.1} parent=1 // pred_check
      _
    $region3: #{tpu_custom_call.1} parent=1 // pred_check_branch
      %14 = sbr.rel (0) target = $region5
    $region4: #{tpu_custom_call.1} parent=1 // pred_region
      %16 = vsyncadd [#allocation5], 0
      %s18 = sshll.u32 %s0, 4
      %s19 = int_to_ptr.hbm [resolvable:$true] %s18
      %s20 = sshll.u32 [#allocation4], 4
      %s21 = int_to_ptr.vmem [resolvable:$true] %s20
      %23 = dma.hbm_to_vmem [thread:$0]  %s19, 128, %s21, [#allocation5]
    $region5: #{tpu_custom_call.1} parent=1 // pred_fallthru
      _
    // Predicated region
    $region6: #{tpu_custom_call.1} parent=1 // pred_check
      _
    $region7: #{tpu_custom_call.1} parent=1 // pred_check_branch
      %25 = sbr.rel (0) target = $region9
    $region8: #{tpu_custom_call.1} parent=1 // pred_region
      %27 = vsyncadd [#allocation8], 0
      %s29 = sshll.u32 %s1, 4
      %s30 = int_to_ptr.hbm [resolvable:$true] %s29
      %s31 = sshll.u32 [#allocation7], 4
      %s32 = int_to_ptr.vmem [resolvable:$true] %s31
      %34 = dma.hbm_to_vmem [thread:$0]  %s30, 128, %s32, [#allocation8]
    $region9: #{tpu_custom_call.1} parent=1 // pred_fallthru
      _
    // Predicated region
    $region10: #{tpu_custom_call.1} parent=1 // pred_check
      _
    $region11: #{tpu_custom_call.1} parent=1 // pred_check_branch
      %36 = sbr.rel (0) target = $region13
    $region12: #{tpu_custom_call.1} parent=1 // pred_region
      %38 = vsyncadd [#allocation8], 0
      %s39 = sshll.u32 %s2, 4
      %s40 = int_to_ptr.hbm [resolvable:$true] %s39
      %s41 = sshll.u32 [#allocation9], 4
      %s42 = int_to_ptr.vmem [resolvable:$true] %s41
      %47 = dma.hbm_to_vmem [thread:$0]  %s40, 2048, %s42, [#allocation8], 128, 128, 8
    $region13: #{tpu_custom_call.1} parent=1 // pred_fallthru
      _
    // Predicated region
    $region14: #{tpu_custom_call.1} parent=1 // pred_check
      _
    $region15: #{tpu_custom_call.1} parent=1 // pred_check_branch
      %49 = sbr.rel (0) target = $region17
    $region16: #{tpu_custom_call.1} parent=1 // pred_region
      %51 = vsyncadd [#allocation11], 0
      %s52 = sshll.u32 %s3, 4
      %s53 = int_to_ptr.hbm [resolvable:$true] %s52
      %s54 = sshll.u32 [#allocation10], 4
      %s55 = int_to_ptr.vmem [resolvable:$true] %s54
      %60 = dma.hbm_to_vmem [thread:$0]  %s53, 4096, %s55, [#allocation11], 256, 256, 16
    $region17: #{tpu_custom_call.1} parent=1 // pred_fallthru
      _
    // Predicated region
    $region18: #{tpu_custom_call.1} parent=1 // pred_check
      _
    $region19: #{tpu_custom_call.1} parent=1 // pred_check_branch
      %62 = sbr.rel (0) target = $region21
    $region20: #{tpu_custom_call.1} parent=1 // pred_region
      %64 = dma.done [#allocation5], 128
    $region21: #{tpu_custom_call.1} parent=1 // pred_fallthru
      _
    // Predicated region
    $region22: #{tpu_custom_call.1} parent=1 // pred_check
      _
    $region23: #{tpu_custom_call.1} parent=1 // pred_check_branch
      %66 = sbr.rel (0) target = $region25
    $region24: #{tpu_custom_call.1} parent=1 // pred_region
      %68 = dma.done [#allocation8], 128
    $region25: #{tpu_custom_call.1} parent=1 // pred_fallthru
      _
    // Predicated region
    $region26: #{tpu_custom_call.1} parent=1 // pred_check
      _
    $region27: #{tpu_custom_call.1} parent=1 // pred_check_branch
      %70 = sbr.rel (0) target = $region29
    $region28: #{tpu_custom_call.1} parent=1 // pred_region
      %72 = dma.done [#allocation8], 2048
    $region29: #{tpu_custom_call.1} parent=1 // pred_fallthru
      _
    // Predicated region
    $region30: #{tpu_custom_call.1} parent=1 // pred_check
      _
    $region31: #{tpu_custom_call.1} parent=1 // pred_check_branch
      %74 = sbr.rel (0) target = $region33
    $region32: #{tpu_custom_call.1} parent=1 // pred_region
      %76 = dma.done [#allocation11], 4096
    $region33: #{tpu_custom_call.1} parent=1 // pred_fallthru
      _
    %p77 = scmp.eq.s32.totalorder 0, 0
    // Predicated region
    $region34: #{tpu_custom_call.1} parent=1 // pred_check
      %p78 = pneg %p77
    $region35: #{tpu_custom_call.1} parent=1 // pred_check_branch
      %80 = sbr.rel (%p78) target = $region37
    $region36: #{tpu_custom_call.1} parent=1 // pred_region
      %v81 = vld [vmem:[#allocation7] sm:$0xff]
      %v82 = vld [vmem:[#allocation10] sm:$0xff]
      %v83 = vld [vmem:[#allocation10 + $0x8] sm:$0xff]
      %v84 = vld [vmem:[#allocation10 + $0x10] sm:$0xff]
      %v85 = vld [vmem:[#allocation10 + $0x18] sm:$0xff]
      %v86 = vld [vmem:[#allocation10 + $0x20] sm:$0xff]
      %v87 = vld [vmem:[#allocation10 + $0x28] sm:$0xff]
      %v88 = vld [vmem:[#allocation10 + $0x30] sm:$0xff]
      %v89 = vld [vmem:[#allocation10 + $0x38] sm:$0xff]
      %v90 = vld [vmem:[#allocation10 + $0x40] sm:$0xff]
      %v91 = vld [vmem:[#allocation10 + $0x48] sm:$0xff]
      %v92 = vld [vmem:[#allocation10 + $0x50] sm:$0xff]
      %v93 = vld [vmem:[#allocation10 + $0x58] sm:$0xff]
      %v94 = vld [vmem:[#allocation10 + $0x60] sm:$0xff]
      %v95 = vld [vmem:[#allocation10 + $0x68] sm:$0xff]
      %v96 = vld [vmem:[#allocation10 + $0x70] sm:$0xff]
      %v97 = vld [vmem:[#allocation10 + $0x78] sm:$0xff]
      %v98 = vld [vmem:[#allocation10 + $0x80] sm:$0xff]
      %v99 = vld [vmem:[#allocation10 + $0x88] sm:$0xff]
      %v100 = vld [vmem:[#allocation10 + $0x90] sm:$0xff]
      %v101 = vld [vmem:[#allocation10 + $0x98] sm:$0xff]
      %v102 = vld [vmem:[#allocation10 + $0xa0] sm:$0xff]
      %v103 = vld [vmem:[#allocation10 + $0xa8] sm:$0xff]
      %v104 = vld [vmem:[#allocation10 + $0xb0] sm:$0xff]
      %v105 = vld [vmem:[#allocation10 + $0xb8] sm:$0xff]
      %v106 = vld [vmem:[#allocation10 + $0xc0] sm:$0xff]
      %v107 = vld [vmem:[#allocation10 + $0xc8] sm:$0xff]
      %v108 = vld [vmem:[#allocation10 + $0xd0] sm:$0xff]
      %v109 = vld [vmem:[#allocation10 + $0xd8] sm:$0xff]
      %v110 = vld [vmem:[#allocation10 + $0xe0] sm:$0xff]
      %v111 = vld [vmem:[#allocation10 + $0xe8] sm:$0xff]
      %v112 = vld [vmem:[#allocation10 + $0xf0] sm:$0xff]
      %v113 = vld [vmem:[#allocation10 + $0xf8] sm:$0xff]
      %114 = vmatpush.msra.mxu0 %v112
      %115 = vmatpush.msra.mxu0 %v110
      %116 = vmatpush.msra.mxu0 %v108
      %117 = vmatpush.msra.mxu0 %v106
      %118 = vmatpush.msra.mxu0 %v104
      %119 = vmatpush.msra.mxu0 %v102
      %120 = vmatpush.msra.mxu0 %v100
      %121 = vmatpush.msra.mxu0 %v98
      %122 = vmatpush.msra.mxu0 %v96
      %123 = vmatpush.msra.mxu0 %v94
      %124 = vmatpush.msra.mxu0 %v92
      %125 = vmatpush.msra.mxu0 %v90
      %126 = vmatpush.msra.mxu0 %v88
      %127 = vmatpush.msra.mxu0 %v86
      %128 = vmatpush.msra.mxu0 %v84
      %129 = vmatpush.msra.mxu0 %v82
      %130 = vmatmul.f32.gmra.mxu0 %v81
      %v131 = vpop.f32.mrf.mxu0
      %v132 = vadd.f32 0.0, %v131
      %133 = vdwg.mxu0
      %134 = vmatpush.msra.mxu0 %v113
      %135 = vmatpush.msra.mxu0 %v111
      %136 = vmatpush.msra.mxu0 %v109
      %137 = vmatpush.msra.mxu0 %v107
      %138 = vmatpush.msra.mxu0 %v105
      %139 = vmatpush.msra.mxu0 %v103
      %140 = vmatpush.msra.mxu0 %v101
      %141 = vmatpush.msra.mxu0 %v99
      %142 = vmatpush.msra.mxu0 %v97
      %143 = vmatpush.msra.mxu0 %v95
      %144 = vmatpush.msra.mxu0 %v93
      %145 = vmatpush.msra.mxu0 %v91
      %146 = vmatpush.msra.mxu0 %v89
      %147 = vmatpush.msra.mxu0 %v87
      %148 = vmatpush.msra.mxu0 %v85
      %149 = vmatpush.msra.mxu0 %v83
      %150 = vmatmul.f32.gmra.mxu0 %v81
      %v151 = vpop.f32.mrf.mxu0
      %v152 = vadd.f32 0.0, %v151
      %153 = vdwg.mxu0
      %154 = vst [vmem:[#allocation2] sm:$0xff] %v132
      %155 = vst [vmem:[#allocation3] sm:$0xff] %v152
    $region37: #{tpu_custom_call.1} parent=1 // pred_fallthru
      _
    %v156 = vld [vmem:[#allocation4] sm:$0xff]
    %v157 = vld [vmem:[#allocation9] sm:$0xff]
    %v158 = vld [vmem:[#allocation9 + $0x8] sm:$0xff]
    %v159 = vld [vmem:[#allocation9 + $0x10] sm:$0xff]
    %v160 = vld [vmem:[#allocation9 + $0x18] sm:$0xff]
    %v161 = vld [vmem:[#allocation9 + $0x20] sm:$0xff]
    %v162 = vld [vmem:[#allocation9 + $0x28] sm:$0xff]
    %v163 = vld [vmem:[#allocation9 + $0x30] sm:$0xff]
    %v164 = vld [vmem:[#allocation9 + $0x38] sm:$0xff]
    %v165 = vld [vmem:[#allocation9 + $0x40] sm:$0xff]
    %v166 = vld [vmem:[#allocation9 + $0x48] sm:$0xff]
    %v167 = vld [vmem:[#allocation9 + $0x50] sm:$0xff]
    %v168 = vld [vmem:[#allocation9 + $0x58] sm:$0xff]
    %v169 = vld [vmem:[#allocation9 + $0x60] sm:$0xff]
    %v170 = vld [vmem:[#allocation9 + $0x68] sm:$0xff]
    %v171 = vld [vmem:[#allocation9 + $0x70] sm:$0xff]
    %v172 = vld [vmem:[#allocation9 + $0x78] sm:$0xff]
    %173 = vmatpush.msra.mxu0 %v172
    %174 = vmatpush.msra.mxu0 %v171
    %175 = vmatpush.msra.mxu0 %v170
    %176 = vmatpush.msra.mxu0 %v169
    %177 = vmatpush.msra.mxu0 %v168
    %178 = vmatpush.msra.mxu0 %v167
    %179 = vmatpush.msra.mxu0 %v166
    %180 = vmatpush.msra.mxu0 %v165
    %181 = vmatpush.msra.mxu0 %v164
    %182 = vmatpush.msra.mxu0 %v163
    %183 = vmatpush.msra.mxu0 %v162
    %184 = vmatpush.msra.mxu0 %v161
    %185 = vmatpush.msra.mxu0 %v160
    %186 = vmatpush.msra.mxu0 %v159
    %187 = vmatpush.msra.mxu0 %v158
    %188 = vmatpush.msra.mxu0 %v157
    %189 = vmatmul.f32.gmra.mxu0 %v156
    %v190 = vpop.f32.mrf.mxu0
    %v191 = vadd.f32 0.0, %v190
    %192 = vdwg.mxu0
    %v193 = vld [vmem:[#allocation2] sm:$0xff]
    %194 = vmatpush.xpose.msra.mxu0 0.0
    %195 = vmatpush.xpose.msra.mxu0 0.0
    %196 = vmatpush.xpose.msra.mxu0 0.0
    %197 = vmatpush.xpose.msra.mxu0 0.0
    %198 = vmatpush.xpose.msra.mxu0 0.0
    %199 = vmatpush.xpose.msra.mxu0 0.0
    %200 = vmatpush.xpose.msra.mxu0 0.0
    %201 = vmatpush.xpose.msra.mxu0 0.0
    %202 = vmatpush.xpose.msra.mxu0 0.0
    %203 = vmatpush.xpose.msra.mxu0 0.0
    %204 = vmatpush.xpose.msra.mxu0 0.0
    %205 = vmatpush.xpose.msra.mxu0 0.0
    %206 = vmatpush.xpose.msra.mxu0 0.0
    %207 = vmatpush.xpose.msra.mxu0 0.0
    %208 = vmatpush.xpose.msra.mxu0 0.0
    %209 = vmatpush.xpose.msra.mxu0 %v193
    %210 = vmatmul.f32.gmra.mxu0 %v191
    %v211 = vpop.f32.mrf.mxu0
    %v212 = vadd.f32 0.0, %v211
    %213 = vdwg.mxu0
    %vm214 = vcmask 64512
    %v215 = vsel %vm214, %v212, -inf
    %216 = vmax.xlane.f32.xlu0 %v215
    %v217 = vpop.xlane.xlu0 %216
    %v218 = vsub.f32 %v212, %v217
    %v219 = vmul.f32 %v218, 1.442695
    %v220 = vpow.pop %v219
    %v221 = vsel %vm214, %v220, 0.0
    %222 = vadd.xlane.f32.xlu0 %v221
    %v223 = vpop.xlane.xlu0 %222
    %v224 = vld [vmem:[#allocation3] sm:$0xff]
    %v226 = vsel %vm214, %v220, 0
    %228 = vmatpush.msra.mxu0 0.0
    %229 = vmatpush.msra.mxu0 0.0
    %230 = vmatpush.msra.mxu0 0.0
    %231 = vmatpush.msra.mxu0 0.0
    %232 = vmatpush.msra.mxu0 0.0
    %233 = vmatpush.msra.mxu0 0.0
    %234 = vmatpush.msra.mxu0 0.0
    %235 = vmatpush.msra.mxu0 0.0
    %236 = vmatpush.msra.mxu0 0.0
    %237 = vmatpush.msra.mxu0 0.0
    %238 = vmatpush.msra.mxu0 0.0
    %239 = vmatpush.msra.mxu0 0.0
    %240 = vmatpush.msra.mxu0 0.0
    %241 = vmatpush.msra.mxu0 0.0
    %242 = vmatpush.msra.mxu0 0.0
    %243 = vmatpush.msra.mxu0 %v224
    %244 = vmatmul.f32.gmra.mxu0 %v226
    %v245 = vpop.f32.mrf.mxu0
    %v246 = vadd.f32 0.0, %v245
    %247 = vdwg.mxu0
    %v248 = vrcp.pop %v223
    %v249 = vmul.f32 %v246, %v248
    %250 = vst [vmem:[#allocation12] sm:$0xff] %v249
    // Predicated region
    $region38: #{tpu_custom_call.1} parent=1 // pred_check
      _
    $region39: #{tpu_custom_call.1} parent=1 // pred_check_branch
      %252 = sbr.rel (0) target = $region41
    $region40: #{tpu_custom_call.1} parent=1 // pred_region
      %254 = vsyncadd [#allocation6], 0
      %s256 = sshll.u32 [#allocation12], 4
      %s257 = int_to_ptr.vmem [resolvable:$true] %s256
      %s258 = sshll.u32 %s4, 4
      %s259 = int_to_ptr.hbm [resolvable:$true] %s258
      %261 = dma.vmem_to_hbm [thread:$0]  %s257, 128, %s259, [#allocation6]
    $region41: #{tpu_custom_call.1} parent=1 // pred_fallthru
      _
    // Predicated region
    $region42: #{tpu_custom_call.1} parent=1 // pred_check
      _
    $region43: #{tpu_custom_call.1} parent=1 // pred_check_branch
      %263 = sbr.rel (0) target = $region45
    $region44: #{tpu_custom_call.1} parent=1 // pred_region
      %265 = dma.done [#allocation6], 128
    $region45: #{tpu_custom_call.1} parent=1 // pred_fallthru
      _
    %266 = vsyncpa [#allocation5], 1
    %267 = vsyncpa [#allocation8], 1
    %268 = vsyncpa [#allocation11], 1
    %269 = vsyncpa [#allocation6], 1

</llo_original>
